<compile_context>
chip_gen: v7x
topology: tpu7x:2x2x1
jax: 0.10.0
libtpu: 0.0.40
codegen_flags: <defaults>
</compile_context>

<pallas_src>
import math

import jax
import jax.numpy as jnp
from jax.experimental import pallas as pl
from jax.experimental.pallas import tpu as pltpu

WEIGHT_REGULARIZER = 1e-6
DROPOUT_REGULARIZER = 1e-5
EPS = 1e-7
TEMP = 0.1
HALF_INV_TEMP = 0.5 / TEMP  # /temp folded with the /2 of the tanh-form sigmoid

LANE = 512            # lane width: large multiple of 128 -> unmasked lane-dense vst
MAX_TILE_ROWS = 1024  # 1024 x 512 f32 block = 2 MiB per buffer (12 MiB resident w/ 3 streams)


# ----------------------------- Pallas kernel ------------------------------- #

def _concrete_dropout_kernel(scalars_ref, x_ref, u_ref, o_ref):
    """Elementwise concrete-dropout hot path.

    scalars_ref : SMEM f32[2] -- [0.5*(log(p+eps)-log(1-p+eps))/temp, 0.5/(1-p)]
    x_ref       : VMEM (tile_rows, LANE) -- input tile
    u_ref       : VMEM (tile_rows, LANE) -- U[0,1) noise tile
    o_ref       : VMEM (tile_rows, LANE) -- output tile
    """
    c_half = scalars_ref[0]           # hoisted: 0.5 * logit(p) / temp
    half_inv_retain = scalars_ref[1]  # hoisted: 0.5 / (1 - p)

    x = x_ref[...].astype(jnp.float32)
    u = u_ref[...]
    # z/2 where z is the concrete-dropout logit (scalar part precomputed).
    half_z = c_half + HALF_INV_TEMP * (jnp.log(u + EPS) - jnp.log(1.0 - u + EPS))
    # x * (1 - sigmoid(z)) / (1 - p)  ==  x * (0.5/(1-p)) * (1 - tanh(z/2))
    o_ref[...] = (x * (half_inv_retain * (1.0 - jnp.tanh(half_z)))).astype(o_ref.dtype)


# ------------------------------- Wrapper ----------------------------------- #

def concrete_dropout_forward(x, p_logit, layer_params, noise_key,
                             weight_regularizer=WEIGHT_REGULARIZER,
                             dropout_regularizer=DROPOUT_REGULARIZER):
    """Forward pass of ConcreteDropout.

    x            : (N, C, H, W) array (NCHW, like PyTorch)
    p_logit      : (1,) f32 parameter
    layer_params : list of arrays (the wrapped layer's parameters)
    noise_key    : jax PRNG key (drives the uniform noise, like torch.rand_like)
    Returns (out, regularization): out shaped like x, regularization scalar.
    """
    orig_shape = x.shape
    orig_dtype = x.dtype
    input_dim = int(math.prod(x.shape[1:]))  # x[0].numel()
    total = int(math.prod(x.shape))

    # --- hoisted scalar math (runs once; tiny XLA ops) ---
    p = jax.nn.sigmoid(jnp.asarray(p_logit, jnp.float32).reshape(()))
    c_half = 0.5 * (jnp.log(p + EPS) - jnp.log(1.0 - p + EPS)) / TEMP
    half_inv_retain = 0.5 / (1.0 - p)
    scalars = jnp.stack([c_half, half_inv_retain]).astype(jnp.float32)

    # --- lane-dense 2-D slab. Pad ONLY the sub-LANE remainder (< 512 elems);
    #     ragged rows along the grid axis are handled by Pallas directly. ---
    rows = pl.cdiv(total, LANE)
    padded = rows * LANE
    flat = x.reshape(-1)
    if padded != total:
        flat = jnp.pad(flat, (0, padded - total))
    x2 = flat.reshape(rows, LANE)

    # Uniform noise generated directly at the slab shape (no pad / reshape copies).
    u2 = jax.random.uniform(noise_key, (rows, LANE), dtype=jnp.float32)

    tile_rows = min(MAX_TILE_ROWS, rows)   # full extent if small, else 1024 (÷8 ok)
    grid = (pl.cdiv(rows, tile_rows),)     # ragged final block is fine (elementwise)

    out2 = pl.pallas_call(
        _concrete_dropout_kernel,
        out_shape=jax.ShapeDtypeStruct((rows, LANE), orig_dtype),
        grid=grid,
        in_specs=[
            pl.BlockSpec(memory_space=pltpu.MemorySpace.SMEM),   # hoisted scalars
            pl.BlockSpec((tile_rows, LANE), lambda i: (i, 0)),   # x tile
            pl.BlockSpec((tile_rows, LANE), lambda i: (i, 0)),   # noise tile
        ],
        out_specs=pl.BlockSpec((tile_rows, LANE), lambda i: (i, 0)),
        compiler_params=pltpu.CompilerParams(
            dimension_semantics=("parallel",)),
    )(scalars, x2, u2)

    if padded != total:
        out = out2.reshape(-1)[:total].reshape(orig_shape)
    else:
        out = out2.reshape(orig_shape)     # free bitcast-style reshape

    # --- regularizer: O(100)-element reduction; a dedicated kernel launch would
    #     cost more than the math, so leave it to XLA. ---
    sum_of_square = jnp.asarray(0.0, jnp.float32)
    for param in layer_params:
        sum_of_square = sum_of_square + jnp.sum(jnp.square(param.astype(jnp.float32)))
    weights_reg = weight_regularizer * sum_of_square / (1.0 - p)
    dropout_reg = p * jnp.log(p) + (1.0 - p) * jnp.log(1.0 - p)
    dropout_reg = dropout_reg * (dropout_regularizer * input_dim)
    regularization = weights_reg + dropout_reg

    return out, regularization


# --------------------------------- Main ------------------------------------ #

if __name__ == "__main__":
    key = jax.random.PRNGKey(0)
    k_x, k_w, k_b, k_p, k_noise = jax.random.split(key, 5)

    # Input: NCHW, batch=2, channels=4, spatial=16x16
    x = jax.random.normal(k_x, (2, 4, 16, 16), dtype=jnp.float32)

    # The wrapped "layer": a conv-like layer with weight (8, 4, 3, 3) + bias (8,)
    layer_weight = jax.random.normal(k_w, (8, 4, 3, 3), dtype=jnp.float32) * 0.1
    layer_bias = jax.random.normal(k_b, (8,), dtype=jnp.float32) * 0.1
    layer_params = [layer_weight, layer_bias]

    # p_logit ~ Uniform(logit(0.1), logit(0.9)), matching __init__
    init_min = math.log(0.1) - math.log(0.9)
    init_max = math.log(0.9) - math.log(0.1)
    p_logit = jax.random.uniform(k_p, (1,), minval=init_min, maxval=init_max,
                                 dtype=jnp.float32)

    out, regularization = concrete_dropout_forward(
        x, p_logit, layer_params, k_noise)
    jax.block_until_ready((out, regularization))

    assert out.shape == x.shape and out.dtype == x.dtype
    assert regularization.shape == ()
    assert bool(jnp.isfinite(regularization))
    assert bool(jnp.all(jnp.isfinite(out)))
    print("KERNEL_OK")
</pallas_src>

<mosaic_0001>
module attributes {stable_mosaic.version = 11 : i64} {
  func.func @_concrete_dropout_kernel(%arg0: i32, %arg1: memref<2xf32, #tpu.memory_space<smem>>, %arg2: memref<4x512xf32, #tpu.memory_space<vmem>>, %arg3: memref<4x512xf32, #tpu.memory_space<vmem>>, %arg4: memref<4x512xf32, #tpu.memory_space<vmem>>) attributes {dimension_semantics = [#tpu.dimension_semantics<parallel>], iteration_bounds = array<i64: 1>, scalar_prefetch = 0 : i64, scratch_operands = 0 : i64, tpu.core_type = #tpu.core_type<tc>, window_params = [{transform_indices = @transform_0, window_bounds = array<i64: 2>}, {transform_indices = @transform_1, window_bounds = array<i64: 4, 512>}, {transform_indices = @transform_2, window_bounds = array<i64: 4, 512>}, {transform_indices = @transform_3, window_bounds = array<i64: 4, 512>}]} {
    %c0 = arith.constant 0 : index
    %0 = memref.load %arg1[%c0] : memref<2xf32, #tpu.memory_space<smem>>
    %c1 = arith.constant 1 : index
    %1 = memref.load %arg1[%c1] : memref<2xf32, #tpu.memory_space<smem>>
    %c0_0 = arith.constant 0 : index
    %c0_1 = arith.constant 0 : index
    %2 = vector.load %arg2[%c0_0, %c0_1] : memref<4x512xf32, #tpu.memory_space<vmem>>, vector<4x512xf32>
    %c0_2 = arith.constant 0 : index
    %c0_3 = arith.constant 0 : index
    %3 = vector.load %arg3[%c0_2, %c0_3] : memref<4x512xf32, #tpu.memory_space<vmem>>, vector<4x512xf32>
    %cst = arith.constant 1.000000e-07 : f32
    %4 = vector.broadcast %cst : f32 to vector<4x512xf32>
    %5 = arith.addf %3, %4 : vector<4x512xf32>
    %6 = math.log %5 : vector<4x512xf32>
    %cst_4 = arith.constant 1.000000e+00 : f32
    %7 = vector.broadcast %cst_4 : f32 to vector<4x512xf32>
    %8 = arith.subf %7, %3 : vector<4x512xf32>
    %cst_5 = arith.constant 1.000000e-07 : f32
    %9 = vector.broadcast %cst_5 : f32 to vector<4x512xf32>
    %10 = arith.addf %8, %9 : vector<4x512xf32>
    %11 = math.log %10 : vector<4x512xf32>
    %12 = arith.subf %6, %11 : vector<4x512xf32>
    %cst_6 = arith.constant 5.000000e+00 : f32
    %13 = vector.broadcast %cst_6 : f32 to vector<4x512xf32>
    %14 = arith.mulf %13, %12 : vector<4x512xf32>
    %15 = vector.broadcast %0 : f32 to vector<4x512xf32>
    %16 = arith.addf %15, %14 : vector<4x512xf32>
    %17 = math.tanh %16 : vector<4x512xf32>
    %cst_7 = arith.constant 1.000000e+00 : f32
    %18 = vector.broadcast %cst_7 : f32 to vector<4x512xf32>
    %19 = arith.subf %18, %17 : vector<4x512xf32>
    %20 = vector.broadcast %1 : f32 to vector<4x512xf32>
    %21 = arith.mulf %20, %19 : vector<4x512xf32>
    %22 = arith.mulf %2, %21 : vector<4x512xf32>
    %c0_8 = arith.constant 0 : index
    %c0_9 = arith.constant 0 : index
    %23 = vector.load %arg4[%c0_8, %c0_9] : memref<4x512xf32, #tpu.memory_space<vmem>>, vector<4x512xf32>
    tpu.vector_store %arg4[%c0_8, %c0_9], %22 {strides = array<i32>} : memref<4x512xf32, #tpu.memory_space<vmem>>, vector<4x512xf32>,
    return
  }
  func.func @transform_0(%arg0: i32) -> i32 {
    %c0_i32 = arith.constant 0 : i32
    %c0_i32_0 = arith.constant 0 : i32
    return %c0_i32 : i32
  }
  func.func @transform_1(%arg0: i32) -> (i32, i32) {
    %c0_i32 = arith.constant 0 : i32
    %c0_i32_0 = arith.constant 0 : i32
    return %arg0, %c0_i32 : i32, i32
  }
  func.func @transform_2(%arg0: i32) -> (i32, i32) {
    %c0_i32 = arith.constant 0 : i32
    %c0_i32_0 = arith.constant 0 : i32
    return %arg0, %c0_i32 : i32, i32
  }
  func.func @transform_3(%arg0: i32) -> (i32, i32) {
    %c0_i32 = arith.constant 0 : i32
    %c0_i32_0 = arith.constant 0 : i32
    return %arg0, %c0_i32 : i32, i32
  }
}

</mosaic_0001>

<llo_original>
// kernel: tpu_custom_call.1
$region0: #{tpu_custom_call.1}
  #allocation0 [shape = 'u32[]', space=smem, size = 0x4, offset = 0x4, fixed_abs, tag = 'smem constant byte address 0x4 - core index']
  #allocation1 [shape = 'u32[144,128]{1,0:T(1,128)}', space=vmem, size = 0x12000, scoped, tag = 'internal scratch']
  %s0 = inlined_call_operand.hbm [shape: f32[2], index: 0, kind: input, shape index: {}]
  %s1 = inlined_call_operand.hbm [shape: f32[4,512], index: 1, kind: input, shape index: {}]
  %s2 = inlined_call_operand.hbm [shape: f32[4,512], index: 2, kind: input, shape index: {}]
  %s3 = inlined_call_operand.hbm [shape: f32[4,512], index: 3, kind: output, shape index: {}]
  %s4 = sld [smem:[#allocation0]]
  $region34: #{tpu_custom_call.1} parent=0
    _
  %s6 = ssub.s32 1, %s4
  %s7 = scalar_select 0, %s6, %s4
  $region1: #{tpu_custom_call.1} parent=0
    #allocation2 [shape = 'u8[512]{0}', space=smem, size = 0x200, scoped, tag = 'input window, operand 0, single buffered']
    #allocation3 [shape = 's32[1]{0}', space=sflag, size = 0x4, scoped, tag = 'scoped memory for tpu_custom_call.1']
    #allocation4 [shape = 's32[1]{0}', space=sflag, size = 0x4, scoped, tag = 'scoped memory for tpu_custom_call.1']
    #allocation5 [shape = 's32[1]{0}', space=sflag, size = 0x4, scoped, tag = 'scoped memory for tpu_custom_call.1']
    #allocation6 [shape = 'u8[8192]{0}', space=vmem, size = 0x2000, scoped, tag = 'input window, operand 1, single buffered']
    #allocation7 [shape = 'u8[8192]{0}', space=vmem, size = 0x2000, scoped, tag = 'input window, operand 2, single buffered']
    #allocation8 [shape = 's32[1]{0}', space=sflag, size = 0x4, scoped, tag = 'scoped memory for tpu_custom_call.1']
    #allocation9 [shape = 'u8[8192]{0}', space=vmem, size = 0x2000, scoped, tag = 'output window, operand 0, single buffered']
    %8 = vsyncpa [#allocation5], 0
    %9 = vsyncpa [#allocation3], 0
    %10 = vsyncpa [#allocation8], 0
    %11 = vsyncpa [#allocation4], 0
    // Predicated region
    $region2: #{tpu_custom_call.1} parent=1 // pred_check
      _
    $region3: #{tpu_custom_call.1} parent=1 // pred_check_branch
      %13 = sbr.rel (0) target = $region5
    $region4: #{tpu_custom_call.1} parent=1 // pred_region
      %s15 = ssub.s32 16, 16
      %16 = vsyncadd [#allocation5], %s15
      %19 = dma.hbm_to_smem %s0, 16, [#allocation2], [#allocation5]
    $region5: #{tpu_custom_call.1} parent=1 // pred_fallthru
      _
    // Predicated region
    $region6: #{tpu_custom_call.1} parent=1 // pred_check
      _
    $region7: #{tpu_custom_call.1} parent=1 // pred_check_branch
      %21 = sbr.rel (0) target = $region9
    $region8: #{tpu_custom_call.1} parent=1 // pred_region
      %s23 = ssub.s32 256, 256
      %24 = vsyncadd [#allocation3], %s23
      %s26 = sshll.u32 [#allocation6], 4
      %s27 = int_to_ptr.vmem [resolvable:$true] %s26
      %29 = dma.hbm_to_vmem [thread:$0]  %s1, 256, %s27, [#allocation3]
    $region9: #{tpu_custom_call.1} parent=1 // pred_fallthru
      _
    // Predicated region
    $region10: #{tpu_custom_call.1} parent=1 // pred_check
      _
    $region11: #{tpu_custom_call.1} parent=1 // pred_check_branch
      %31 = sbr.rel (0) target = $region13
    $region12: #{tpu_custom_call.1} parent=1 // pred_region
      %s33 = ssub.s32 256, 256
      %34 = vsyncadd [#allocation8], %s33
      %s36 = sshll.u32 [#allocation7], 4
      %s37 = int_to_ptr.vmem [resolvable:$true] %s36
      %39 = dma.hbm_to_vmem [thread:$0]  %s2, 256, %s37, [#allocation8]
    $region13: #{tpu_custom_call.1} parent=1 // pred_fallthru
      _
    // Predicated region
    $region14: #{tpu_custom_call.1} parent=1 // pred_check
      _
    $region15: #{tpu_custom_call.1} parent=1 // pred_check_branch
      %41 = sbr.rel (0) target = $region17
    $region16: #{tpu_custom_call.1} parent=1 // pred_region
      %42 = dma.done [#allocation5], 16
    $region17: #{tpu_custom_call.1} parent=1 // pred_fallthru
      _
    // Predicated region
    $region18: #{tpu_custom_call.1} parent=1 // pred_check
      _
    $region19: #{tpu_custom_call.1} parent=1 // pred_check_branch
      %44 = sbr.rel (0) target = $region21
    $region20: #{tpu_custom_call.1} parent=1 // pred_region
      %45 = dma.done [#allocation3], 256
    $region21: #{tpu_custom_call.1} parent=1 // pred_fallthru
      _
    // Predicated region
    $region22: #{tpu_custom_call.1} parent=1 // pred_check
      _
    $region23: #{tpu_custom_call.1} parent=1 // pred_check_branch
      %47 = sbr.rel (0) target = $region25
    $region24: #{tpu_custom_call.1} parent=1 // pred_region
      %48 = dma.done [#allocation8], 256
    $region25: #{tpu_custom_call.1} parent=1 // pred_fallthru
      _
    %49 = sfence
    %s50 = sld [smem:[#allocation2]]
    %s51 = sld [smem:[#allocation2 + $0x1]]
    %v52 = vld [vmem:[#allocation6] sm:$0xff]
    %v53 = vld [vmem:[#allocation6 + $0x8] sm:$0xff]
    %v54 = vld [vmem:[#allocation7] sm:$0xff]
    %v55 = vld [vmem:[#allocation7 + $0x8] sm:$0xff]
    %v56 = vadd.f32 %v54, 1e-07
    %v57 = vadd.f32 %v55, 1e-07
    %v58 = vlog2.pop %v56
    %v59 = vmul.f32 %v58, 0.6931472
    %v60 = vlog2.pop %v57
    %v61 = vmul.f32 %v60, 0.6931472
    %v62 = vsub.f32 1.0, %v54
    %v63 = vsub.f32 1.0, %v55
    %v64 = vadd.f32 %v62, 1e-07
    %v65 = vadd.f32 %v63, 1e-07
    %v66 = vlog2.pop %v64
    %v67 = vmul.f32 %v66, 0.6931472
    %v68 = vlog2.pop %v65
    %v69 = vmul.f32 %v68, 0.6931472
    %v70 = vsub.f32 %v59, %v67
    %v71 = vsub.f32 %v61, %v69
    %v72 = vmul.f32 %v70, 5.0
    %v73 = vmul.f32 %v71, 5.0
    %v74 = vstv %s50
    %v75 = vadd.f32 %v74, %v72
    %v76 = vadd.f32 %v74, %v73
    %v77 = vtanh.pop %v75
    %v78 = vtanh.pop %v76
    %v79 = vsub.f32 1.0, %v77
    %v80 = vsub.f32 1.0, %v78
    %v81 = vstv %s51
    %v82 = vmul.f32 %v81, %v79
    %v83 = vmul.f32 %v81, %v80
    %v84 = vmul.f32 %v52, %v82
    %v85 = vmul.f32 %v53, %v83
    %86 = vst [vmem:[#allocation9] sm:$0xff] %v84
    %87 = vst [vmem:[#allocation9 + $0x8] sm:$0xff] %v85
    // Predicated region
    $region26: #{tpu_custom_call.1} parent=1 // pred_check
      _
    $region27: #{tpu_custom_call.1} parent=1 // pred_check_branch
      %89 = sbr.rel (0) target = $region29
    $region28: #{tpu_custom_call.1} parent=1 // pred_region
      %s91 = ssub.s32 256, 256
      %92 = vsyncadd [#allocation4], %s91
      %s94 = sshll.u32 [#allocation9], 4
      %s95 = int_to_ptr.vmem [resolvable:$true] %s94
      %97 = dma.vmem_to_hbm [thread:$0]  %s95, 256, %s3, [#allocation4]
    $region29: #{tpu_custom_call.1} parent=1 // pred_fallthru
      _
    // Predicated region
    $region30: #{tpu_custom_call.1} parent=1 // pred_check
      _
    $region31: #{tpu_custom_call.1} parent=1 // pred_check_branch
      %99 = sbr.rel (0) target = $region33
    $region32: #{tpu_custom_call.1} parent=1 // pred_region
      %100 = dma.done [#allocation4], 256
    $region33: #{tpu_custom_call.1} parent=1 // pred_fallthru
      _
    %101 = vsyncpa [#allocation3], 1
    %102 = vsyncpa [#allocation8], 1
    %103 = vsyncpa [#allocation4], 1
    %104 = vsyncpa [#allocation5], 1

</llo_original>
